<compile_context>
chip_gen: v7x
topology: tpu7x:2x2x1
jax: 0.10.0
libtpu: 0.0.40
codegen_flags: <defaults>
</compile_context>

<pallas_src>
import jax
import jax.numpy as jnp
from jax.experimental import pallas as pl
from jax.experimental.pallas import tpu as pltpu

D_IN, H1, H2, D_OUT = 100, 256, 256, 784
D_IN_PAD = 128     # 100 -> 1 x 128 lanes (zero-filled; hits zero rows of w1)


def _round_up(x, m):
    return ((x + m - 1) // m) * m


def _generator_kernel(x_ref, w1_ref, b1_ref, w2_ref, b2_ref, w3_ref, b3_ref,
                      o_ref):
    # x tile already bf16 (cast + padded in the wrapper); accumulate in f32.
    h = jnp.dot(x_ref[...], w1_ref[...], preferred_element_type=jnp.float32)
    h = jnp.maximum(h + b1_ref[...], 0.0)                 # ReLU (f32)

    h = jnp.dot(h.astype(jnp.bfloat16), w2_ref[...],
                preferred_element_type=jnp.float32)
    h = jnp.maximum(h + b2_ref[...], 0.0)                 # ReLU (f32)

    h = jnp.dot(h.astype(jnp.bfloat16), w3_ref[...],
                preferred_element_type=jnp.float32)
    o_ref[...] = jnp.tanh(h + b3_ref[...]).astype(o_ref.dtype)   # Tanh


def init_params(key):
    """f32 params matching nn.Linear default init: U(-1/sqrt(fan_in), +)."""
    ks = jax.random.split(key, 6)

    def lin(kw, kb, fan_in, fan_out):
        bound = 1.0 / jnp.sqrt(jnp.float32(fan_in))
        w = jax.random.uniform(kw, (fan_in, fan_out), jnp.float32, -bound, bound)
        b = jax.random.uniform(kb, (1, fan_out), jnp.float32, -bound, bound)
        return w, b

    w1, b1 = lin(ks[0], ks[1], D_IN, H1)
    w2, b2 = lin(ks[2], ks[3], H1, H2)
    w3, b3 = lin(ks[4], ks[5], H2, D_OUT)
    return dict(w1=w1, b1=b1, w2=w2, b2=b2, w3=w3, b3=b3)


def prepare_params(p):
    """Pad w1's K dim to 128 lanes and cast weights to bf16 for the MXU."""
    w1 = jnp.zeros((D_IN_PAD, H1), jnp.float32).at[:D_IN, :].set(p["w1"])
    return dict(
        w1=w1.astype(jnp.bfloat16),
        b1=p["b1"].astype(jnp.float32),
        w2=p["w2"].astype(jnp.bfloat16),
        b2=p["b2"].astype(jnp.float32),
        w3=p["w3"].astype(jnp.bfloat16),      # (256, 784) — stored unpadded
        b3=p["b3"].astype(jnp.float32),
    )


def _pick_tile(B):
    """16-aligned batch tile; big batches get large tiles but >= 2 of them
    (so both v7x TensorCores receive work via the parallel grid axis)."""
    if B < 256:
        return _round_up(max(B, 1), 16)
    return min(1024, _round_up(pl.cdiv(B, 2), 16))


def generator_forward(x, kp, out_dtype=jnp.float32):
    """x: (B, 100) f32 latent.  kp: prepared (padded, bf16) params.

    Returns (B, 784) in `out_dtype` (f32 by default; pass jnp.bfloat16 to
    halve output HBM traffic if the consumer tolerates it)."""
    B = x.shape[0]
    TB = _pick_tile(B)
    n_tiles = pl.cdiv(B, TB)
    B_pad = n_tiles * TB

    # bf16 latent, zero-padded: padded columns hit zero rows of padded w1,
    # padded rows are sliced off after the call -> exact.
    x_pad = jnp.zeros((B_pad, D_IN_PAD), jnp.bfloat16)
    x_pad = x_pad.at[:B, :D_IN].set(x.astype(jnp.bfloat16))

    tiled = lambda r, c: pl.BlockSpec((r, c), lambda i: (i, 0))
    resident = lambda r, c: pl.BlockSpec((r, c), lambda i: (0, 0))

    # Larger tiles need headroom above v5e's 16 MiB default scoped VMEM.
    vmem_limit = (32 << 20) if TB >= 256 else None

    out = pl.pallas_call(
        _generator_kernel,
        out_shape=jax.ShapeDtypeStruct((B_pad, D_OUT), out_dtype),
        grid=(n_tiles,),
        in_specs=[
            tiled(TB, D_IN_PAD),                        # x: streamed per tile
            resident(D_IN_PAD, H1), resident(1, H1),    # layer 1 (VMEM-resident)
            resident(H1, H2), resident(1, H2),          # layer 2
            resident(H2, D_OUT), resident(1, D_OUT),    # layer 3 (784 wide)
        ],
        out_specs=tiled(TB, D_OUT),                     # direct 784-wide write
        compiler_params=pltpu.CompilerParams(
            dimension_semantics=("parallel",),
            vmem_limit_bytes=vmem_limit),
    )(x_pad, kp["w1"], kp["b1"], kp["w2"], kp["b2"], kp["w3"], kp["b3"])

    return out if B_pad == B else out[:B]


def reference_forward(x, p):
    h = jnp.maximum(x @ p["w1"] + p["b1"], 0.0)
    h = jnp.maximum(h @ p["w2"] + p["b2"], 0.0)
    return jnp.tanh(h @ p["w3"] + p["b3"])


if __name__ == "__main__":
    key = jax.random.PRNGKey(0)
    k_param, k_x = jax.random.split(key)

    params = init_params(k_param)         # f32 reference params
    kparams = prepare_params(params)      # padded bf16 kernel params

    batch = 8
    x = jax.random.normal(k_x, (batch, D_IN), jnp.float32)  # latent noise z

    out = generator_forward(x, kparams)
    out = jax.block_until_ready(out)

    ref = reference_forward(x, params)    # pure-f32 reference
    assert out.shape == (batch, D_OUT)
    assert out.dtype == jnp.float32
    # bf16 weights/activations on the MXU -> loosened tolerance vs f32 reference.
    assert jnp.allclose(out, ref, atol=5e-2, rtol=5e-2), \
        float(jnp.max(jnp.abs(out - ref)))

    print("KERNEL_OK")
</pallas_src>

<mosaic_0001>
module attributes {stable_mosaic.version = 11 : i64} {
  func.func @_generator_kernel(%arg0: i32, %arg1: memref<16x128xbf16, #tpu.memory_space<vmem>>, %arg2: memref<128x256xbf16, #tpu.memory_space<vmem>>, %arg3: memref<1x256xf32, #tpu.memory_space<vmem>>, %arg4: memref<256x256xbf16, #tpu.memory_space<vmem>>, %arg5: memref<1x256xf32, #tpu.memory_space<vmem>>, %arg6: memref<256x784xbf16, #tpu.memory_space<vmem>>, %arg7: memref<1x784xf32, #tpu.memory_space<vmem>>, %arg8: memref<16x784xf32, #tpu.memory_space<vmem>>) attributes {dimension_semantics = [#tpu.dimension_semantics<parallel>], iteration_bounds = array<i64: 1>, scalar_prefetch = 0 : i64, scratch_operands = 0 : i64, tpu.core_type = #tpu.core_type<tc>, window_params = [{transform_indices = @transform_0, window_bounds = array<i64: 16, 128>}, {pipeline_mode = #tpu.pipeline_mode<synchronous>, transform_indices = @transform_1, window_bounds = array<i64: 128, 256>}, {pipeline_mode = #tpu.pipeline_mode<synchronous>, transform_indices = @transform_2, window_bounds = array<i64: 1, 256>}, {pipeline_mode = #tpu.pipeline_mode<synchronous>, transform_indices = @transform_3, window_bounds = array<i64: 256, 256>}, {pipeline_mode = #tpu.pipeline_mode<synchronous>, transform_indices = @transform_4, window_bounds = array<i64: 1, 256>}, {pipeline_mode = #tpu.pipeline_mode<synchronous>, transform_indices = @transform_5, window_bounds = array<i64: 256, 784>}, {pipeline_mode = #tpu.pipeline_mode<synchronous>, transform_indices = @transform_6, window_bounds = array<i64: 1, 784>}, {transform_indices = @transform_7, window_bounds = array<i64: 16, 784>}]} {
    %c0 = arith.constant 0 : index
    %c0_0 = arith.constant 0 : index
    %0 = vector.load %arg1[%c0, %c0_0] : memref<16x128xbf16, #tpu.memory_space<vmem>>, vector<16x128xbf16>
    %c0_1 = arith.constant 0 : index
    %c0_2 = arith.constant 0 : index
    %1 = vector.load %arg2[%c0_1, %c0_2] : memref<128x256xbf16, #tpu.memory_space<vmem>>, vector<128x256xbf16>
    %cst = arith.constant dense<0.000000e+00> : vector<16x256xf32>
    %2 = tpu.matmul %0, %1, %cst {dimension_numbers = #tpu.dot_dimension_numbers<[1], [0], [0], [1], [0, 0, 1, 1], [], []>} : vector<16x128xbf16>, vector<128x256xbf16>, vector<16x256xf32> -> vector<16x256xf32>
    %c0_3 = arith.constant 0 : index
    %c0_4 = arith.constant 0 : index
    %3 = vector.load %arg3[%c0_3, %c0_4] : memref<1x256xf32, #tpu.memory_space<vmem>>, vector<1x256xf32>
    %4 = vector.broadcast %3 : vector<1x256xf32> to vector<16x256xf32>
    %5 = arith.addf %2, %4 : vector<16x256xf32>
    %cst_5 = arith.constant 0.000000e+00 : f32
    %6 = vector.broadcast %cst_5 : f32 to vector<16x256xf32>
    %7 = arith.maximumf %5, %6 : vector<16x256xf32>
    %8 = arith.truncf %7 : vector<16x256xf32> to vector<16x256xbf16>
    %c0_6 = arith.constant 0 : index
    %c0_7 = arith.constant 0 : index
    %9 = vector.load %arg4[%c0_6, %c0_7] : memref<256x256xbf16, #tpu.memory_space<vmem>>, vector<256x256xbf16>
    %cst_8 = arith.constant dense<0.000000e+00> : vector<16x256xf32>
    %10 = tpu.matmul %8, %9, %cst_8 {dimension_numbers = #tpu.dot_dimension_numbers<[1], [0], [0], [1], [0, 0, 1, 1], [], []>} : vector<16x256xbf16>, vector<256x256xbf16>, vector<16x256xf32> -> vector<16x256xf32>
    %c0_9 = arith.constant 0 : index
    %c0_10 = arith.constant 0 : index
    %11 = vector.load %arg5[%c0_9, %c0_10] : memref<1x256xf32, #tpu.memory_space<vmem>>, vector<1x256xf32>
    %12 = vector.broadcast %11 : vector<1x256xf32> to vector<16x256xf32>
    %13 = arith.addf %10, %12 : vector<16x256xf32>
    %cst_11 = arith.constant 0.000000e+00 : f32
    %14 = vector.broadcast %cst_11 : f32 to vector<16x256xf32>
    %15 = arith.maximumf %13, %14 : vector<16x256xf32>
    %16 = arith.truncf %15 : vector<16x256xf32> to vector<16x256xbf16>
    %c0_12 = arith.constant 0 : index
    %c0_13 = arith.constant 0 : index
    %17 = vector.load %arg6[%c0_12, %c0_13] : memref<256x784xbf16, #tpu.memory_space<vmem>>, vector<256x784xbf16>
    %cst_14 = arith.constant dense<0.000000e+00> : vector<16x784xf32>
    %18 = tpu.matmul %16, %17, %cst_14 {dimension_numbers = #tpu.dot_dimension_numbers<[1], [0], [0], [1], [0, 0, 1, 1], [], []>} : vector<16x256xbf16>, vector<256x784xbf16>, vector<16x784xf32> -> vector<16x784xf32>
    %c0_15 = arith.constant 0 : index
    %c0_16 = arith.constant 0 : index
    %19 = vector.load %arg7[%c0_15, %c0_16] : memref<1x784xf32, #tpu.memory_space<vmem>>, vector<1x784xf32>
    %20 = vector.broadcast %19 : vector<1x784xf32> to vector<16x784xf32>
    %21 = arith.addf %18, %20 : vector<16x784xf32>
    %22 = math.tanh %21 : vector<16x784xf32>
    %c0_17 = arith.constant 0 : index
    %c0_18 = arith.constant 0 : index
    %23 = vector.load %arg8[%c0_17, %c0_18] : memref<16x784xf32, #tpu.memory_space<vmem>>, vector<16x784xf32>
    tpu.vector_store %arg8[%c0_17, %c0_18], %22 {strides = array<i32>} : memref<16x784xf32, #tpu.memory_space<vmem>>, vector<16x784xf32>,
    return
  }
  func.func @transform_0(%arg0: i32) -> (i32, i32) {
    %c0_i32 = arith.constant 0 : i32
    %c0_i32_0 = arith.constant 0 : i32
    return %arg0, %c0_i32 : i32, i32
  }
  func.func @transform_1(%arg0: i32) -> (i32, i32) {
    %c0_i32 = arith.constant 0 : i32
    %c0_i32_0 = arith.constant 0 : i32
    %c0_i32_1 = arith.constant 0 : i32
    return %c0_i32, %c0_i32_0 : i32, i32
  }
  func.func @transform_2(%arg0: i32) -> (i32, i32) {
    %c0_i32 = arith.constant 0 : i32
    %c0_i32_0 = arith.constant 0 : i32
    %c0_i32_1 = arith.constant 0 : i32
    return %c0_i32, %c0_i32_0 : i32, i32
  }
  func.func @transform_3(%arg0: i32) -> (i32, i32) {
    %c0_i32 = arith.constant 0 : i32
    %c0_i32_0 = arith.constant 0 : i32
    %c0_i32_1 = arith.constant 0 : i32
    return %c0_i32, %c0_i32_0 : i32, i32
  }
  func.func @transform_4(%arg0: i32) -> (i32, i32) {
    %c0_i32 = arith.constant 0 : i32
    %c0_i32_0 = arith.constant 0 : i32
    %c0_i32_1 = arith.constant 0 : i32
    return %c0_i32, %c0_i32_0 : i32, i32
  }
  func.func @transform_5(%arg0: i32) -> (i32, i32) {
    %c0_i32 = arith.constant 0 : i32
    %c0_i32_0 = arith.constant 0 : i32
    %c0_i32_1 = arith.constant 0 : i32
    return %c0_i32, %c0_i32_0 : i32, i32
  }
  func.func @transform_6(%arg0: i32) -> (i32, i32) {
    %c0_i32 = arith.constant 0 : i32
    %c0_i32_0 = arith.constant 0 : i32
    %c0_i32_1 = arith.constant 0 : i32
    return %c0_i32, %c0_i32_0 : i32, i32
  }
  func.func @transform_7(%arg0: i32) -> (i32, i32) {
    %c0_i32 = arith.constant 0 : i32
    %c0_i32_0 = arith.constant 0 : i32
    return %arg0, %c0_i32 : i32, i32
  }
}

</mosaic_0001>

<llo_original>
// kernel: tpu_custom_call.1
$region0: #{tpu_custom_call.1}
  #allocation0 [shape = 'u32[]', space=smem, size = 0x4, offset = 0x4, fixed_abs, tag = 'smem constant byte address 0x4 - core index']
  #allocation1 [shape = 'u32[144,128]{1,0:T(1,128)}', space=vmem, size = 0x12000, scoped, tag = 'internal scratch']
  %s0 = inlined_call_operand.vmem [shape: bf16[16,128], index: 0, kind: input, shape index: {}]
  %s1 = inlined_call_operand.vmem [shape: bf16[128,256], index: 1, kind: input, shape index: {}]
  %s2 = inlined_call_operand.vmem [shape: f32[1,256], index: 2, kind: input, shape index: {}]
  %s3 = inlined_call_operand.vmem [shape: bf16[256,256], index: 3, kind: input, shape index: {}]
  %s4 = inlined_call_operand.vmem [shape: f32[1,256], index: 4, kind: input, shape index: {}]
  %s5 = inlined_call_operand.vmem [shape: bf16[256,784], index: 5, kind: input, shape index: {}]
  %s6 = inlined_call_operand.vmem [shape: f32[1,784], index: 6, kind: input, shape index: {}]
  %s7 = inlined_call_operand.hbm [shape: f32[16,784], index: 7, kind: output, shape index: {}]
  %s8 = sld [smem:[#allocation0]]
  $region38: #{tpu_custom_call.1} parent=0
    _
  %s10 = ssub.s32 1, %s8
  %s11 = scalar_select 0, %s10, %s8
  $region1: #{tpu_custom_call.1} parent=0
    #allocation2 [shape = 'u8[57344]{0}', space=vmem, size = 0xe000, scoped, tag = 'output window, operand 0, single buffered']
    #allocation3 [shape = 's32[1]{0}', space=sflag, size = 0x4, scoped, tag = 'scoped memory for tpu_custom_call.1']
    %12 = vsyncpa [#allocation3], 0
    // Predicated region
    $region2: #{tpu_custom_call.1} parent=1 // pred_check
      _
    $region3: #{tpu_custom_call.1} parent=1 // pred_check_branch
      %14 = sbr.rel (0) target = $region5
    $region4: #{tpu_custom_call.1} parent=1 // pred_region
      _
    $region5: #{tpu_custom_call.1} parent=1 // pred_fallthru
      _
    // Predicated region
    $region6: #{tpu_custom_call.1} parent=1 // pred_check
      _
    $region7: #{tpu_custom_call.1} parent=1 // pred_check_branch
      %16 = sbr.rel (0) target = $region9
    $region8: #{tpu_custom_call.1} parent=1 // pred_region
      _
    $region9: #{tpu_custom_call.1} parent=1 // pred_fallthru
      _
    // Predicated region
    $region10: #{tpu_custom_call.1} parent=1 // pred_check
      _
    $region11: #{tpu_custom_call.1} parent=1 // pred_check_branch
      %18 = sbr.rel (0) target = $region13
    $region12: #{tpu_custom_call.1} parent=1 // pred_region
      _
    $region13: #{tpu_custom_call.1} parent=1 // pred_fallthru
      _
    // Predicated region
    $region14: #{tpu_custom_call.1} parent=1 // pred_check
      _
    $region15: #{tpu_custom_call.1} parent=1 // pred_check_branch
      %20 = sbr.rel (0) target = $region17
    $region16: #{tpu_custom_call.1} parent=1 // pred_region
      _
    $region17: #{tpu_custom_call.1} parent=1 // pred_fallthru
      _
    // Predicated region
    $region18: #{tpu_custom_call.1} parent=1 // pred_check
      _
    $region19: #{tpu_custom_call.1} parent=1 // pred_check_branch
      %22 = sbr.rel (0) target = $region21
    $region20: #{tpu_custom_call.1} parent=1 // pred_region
      _
    $region21: #{tpu_custom_call.1} parent=1 // pred_fallthru
      _
    // Predicated region
    $region22: #{tpu_custom_call.1} parent=1 // pred_check
      _
    $region23: #{tpu_custom_call.1} parent=1 // pred_check_branch
      %24 = sbr.rel (0) target = $region25
    $region24: #{tpu_custom_call.1} parent=1 // pred_region
      _
    $region25: #{tpu_custom_call.1} parent=1 // pred_fallthru
      _
    // Predicated region
    $region26: #{tpu_custom_call.1} parent=1 // pred_check
      _
    $region27: #{tpu_custom_call.1} parent=1 // pred_check_branch
      %26 = sbr.rel (0) target = $region29
    $region28: #{tpu_custom_call.1} parent=1 // pred_region
      _
    $region29: #{tpu_custom_call.1} parent=1 // pred_fallthru
      _
    %v28 = vld [vmem:[%s0] sm:$0xf]
    %v29 = vld [vmem:[%s0 + $0x4] sm:$0xf]
    %v30 = vld [vmem:[%s1] sm:$0xff]
    %v31 = vld [vmem:[%s1 + $0x8] sm:$0xff]
    %v32 = vld [vmem:[%s1 + $0x10] sm:$0xff]
    %v33 = vld [vmem:[%s1 + $0x18] sm:$0xff]
    %v34 = vld [vmem:[%s1 + $0x20] sm:$0xff]
    %v35 = vld [vmem:[%s1 + $0x28] sm:$0xff]
    %v36 = vld [vmem:[%s1 + $0x30] sm:$0xff]
    %v37 = vld [vmem:[%s1 + $0x38] sm:$0xff]
    %v38 = vld [vmem:[%s1 + $0x40] sm:$0xff]
    %v39 = vld [vmem:[%s1 + $0x48] sm:$0xff]
    %v40 = vld [vmem:[%s1 + $0x50] sm:$0xff]
    %v41 = vld [vmem:[%s1 + $0x58] sm:$0xff]
    %v42 = vld [vmem:[%s1 + $0x60] sm:$0xff]
    %v43 = vld [vmem:[%s1 + $0x68] sm:$0xff]
    %v44 = vld [vmem:[%s1 + $0x70] sm:$0xff]
    %v45 = vld [vmem:[%s1 + $0x78] sm:$0xff]
    %v46 = vld [vmem:[%s2] sm:$0x3]
    %v48 = vlaneseq
    %v49 = vshrl.u32 %v48, 7
    %v50 = vsub.s32 0, %v49
    %v51 = vrot.slane %v46, %v50
    %v52 = vlaneseq
    %v53 = vshrl.u32 %v52, 7
    %v54 = vsub.s32 1, %v53
    %v55 = vrot.slane %v46, %v54
    %v60 = vunpack.c.l.b16 %v28
    %v61 = vunpack.c.l.b16 %v29
    %v62 = vpack.c.b16 %v61, %v60
    %v80 = vunpack.c.l.b16 %v30
    %v81 = vunpack.c.h.b16 %v30
    %v82 = vunpack.c.l.b16 %v31
    %v83 = vunpack.c.h.b16 %v31
    %v84 = vunpack.c.l.b16 %v32
    %v85 = vunpack.c.h.b16 %v32
    %v86 = vunpack.c.l.b16 %v33
    %v87 = vunpack.c.h.b16 %v33
    %v88 = vunpack.c.l.b16 %v34
    %v89 = vunpack.c.h.b16 %v34
    %v90 = vunpack.c.l.b16 %v35
    %v91 = vunpack.c.h.b16 %v35
    %v92 = vunpack.c.l.b16 %v36
    %v93 = vunpack.c.h.b16 %v36
    %v94 = vunpack.c.l.b16 %v37
    %v95 = vunpack.c.h.b16 %v37
    %v96 = vunpack.c.l.b16 %v38
    %v97 = vunpack.c.h.b16 %v38
    %v98 = vunpack.c.l.b16 %v39
    %v99 = vunpack.c.h.b16 %v39
    %v100 = vunpack.c.l.b16 %v40
    %v101 = vunpack.c.h.b16 %v40
    %v102 = vunpack.c.l.b16 %v41
    %v103 = vunpack.c.h.b16 %v41
    %v104 = vunpack.c.l.b16 %v42
    %v105 = vunpack.c.h.b16 %v42
    %v106 = vunpack.c.l.b16 %v43
    %v107 = vunpack.c.h.b16 %v43
    %v108 = vunpack.c.l.b16 %v44
    %v109 = vunpack.c.h.b16 %v44
    %v110 = vunpack.c.l.b16 %v45
    %v111 = vunpack.c.h.b16 %v45
    %v112 = vpack.c.b16 %v82, %v80
    %v113 = vpack.c.b16 %v83, %v81
    %v114 = vpack.c.b16 %v86, %v84
    %v115 = vpack.c.b16 %v87, %v85
    %v116 = vpack.c.b16 %v90, %v88
    %v117 = vpack.c.b16 %v91, %v89
    %v118 = vpack.c.b16 %v94, %v92
    %v119 = vpack.c.b16 %v95, %v93
    %v120 = vpack.c.b16 %v98, %v96
    %v121 = vpack.c.b16 %v99, %v97
    %v122 = vpack.c.b16 %v102, %v100
    %v123 = vpack.c.b16 %v103, %v101
    %v124 = vpack.c.b16 %v106, %v104
    %v125 = vpack.c.b16 %v107, %v105
    %v126 = vpack.c.b16 %v110, %v108
    %v127 = vpack.c.b16 %v111, %v109
    %144 = vmatprep.subr.bf16.mxu0 %v113
    %145 = vmatpush1.bf16.msra.mxu0 %v112
    %146 = vmatprep.subr.bf16.mxu0 %v115
    %147 = vmatpush1.bf16.msra.mxu0 %v114
    %148 = vmatprep.subr.bf16.mxu0 %v117
    %149 = vmatpush1.bf16.msra.mxu0 %v116
    %150 = vmatprep.subr.bf16.mxu0 %v119
    %151 = vmatpush1.bf16.msra.mxu0 %v118
    %152 = vmatprep.subr.bf16.mxu0 %v121
    %153 = vmatpush1.bf16.msra.mxu0 %v120
    %154 = vmatprep.subr.bf16.mxu0 %v123
    %155 = vmatpush1.bf16.msra.mxu0 %v122
    %156 = vmatprep.subr.bf16.mxu0 %v125
    %157 = vmatpush1.bf16.msra.mxu0 %v124
    %158 = vmatprep.subr.bf16.mxu0 %v127
    %159 = vmatpush1.bf16.msra.mxu0 %v126
    %160 = vmatprep.subr.bf16.mxu0 0
    %161 = vmatpush1.bf16.msra.mxu0 0
    %162 = vmatprep.subr.bf16.mxu0 0
    %163 = vmatpush1.bf16.msra.mxu0 0
    %164 = vmatprep.subr.bf16.mxu0 0
    %165 = vmatpush1.bf16.msra.mxu0 0
    %166 = vmatprep.subr.bf16.mxu0 0
    %167 = vmatpush1.bf16.msra.mxu0 0
    %168 = vmatprep.subr.bf16.mxu0 0
    %169 = vmatpush1.bf16.msra.mxu0 0
    %170 = vmatprep.subr.bf16.mxu0 0
    %171 = vmatpush1.bf16.msra.mxu0 0
    %172 = vmatprep.subr.bf16.mxu0 0
    %173 = vmatpush1.bf16.msra.mxu0 0
    %174 = vmatprep.subr.bf16.mxu0 0
    %175 = vmatpush1.bf16.msra.mxu0 0
    %176 = vmatprep.mubr.bf16.mxu0 0
    %177 = vmatmul.mubr.bf16.gmra.mrb[0].mxu0 %v62
    %v178 = vpop.f32.mrb[0].mxu0
    %v179 = vadd.f32 %v51, %v178
    %v180 = vpop.f32.mrb[0].mxu0
    %v181 = vadd.f32 %v55, %v180
    %v182 = vpop.f32.mrb[0].mxu0
    %v183 = vadd.f32 %v51, %v182
    %v184 = vpop.f32.mrb[0].mxu0
    %v185 = vadd.f32 %v55, %v184
    %186 = vdwg.mxu0
    %v187 = vmax.f32 %v179, 0.0
    %v188 = vmax.f32 %v181, 0.0
    %v189 = vmax.f32 %v183, 0.0
    %v190 = vmax.f32 %v185, 0.0
    %v191 = vpack.c.bf16 %v189, %v187
    %v192 = vpack.c.bf16 %v190, %v188
    %v193 = vld [vmem:[%s3] sm:$0xff]
    %v194 = vld [vmem:[%s3 + $0x8] sm:$0xff]
    %v195 = vld [vmem:[%s3 + $0x10] sm:$0xff]
    %v196 = vld [vmem:[%s3 + $0x18] sm:$0xff]
    %v197 = vld [vmem:[%s3 + $0x20] sm:$0xff]
    %v198 = vld [vmem:[%s3 + $0x28] sm:$0xff]
    %v199 = vld [vmem:[%s3 + $0x30] sm:$0xff]
    %v200 = vld [vmem:[%s3 + $0x38] sm:$0xff]
    %v201 = vld [vmem:[%s3 + $0x40] sm:$0xff]
    %v202 = vld [vmem:[%s3 + $0x48] sm:$0xff]
    %v203 = vld [vmem:[%s3 + $0x50] sm:$0xff]
    %v204 = vld [vmem:[%s3 + $0x58] sm:$0xff]
    %v205 = vld [vmem:[%s3 + $0x60] sm:$0xff]
    %v206 = vld [vmem:[%s3 + $0x68] sm:$0xff]
    %v207 = vld [vmem:[%s3 + $0x70] sm:$0xff]
    %v208 = vld [vmem:[%s3 + $0x78] sm:$0xff]
    %v209 = vld [vmem:[%s3 + $0x80] sm:$0xff]
    %v210 = vld [vmem:[%s3 + $0x88] sm:$0xff]
    %v211 = vld [vmem:[%s3 + $0x90] sm:$0xff]
    %v212 = vld [vmem:[%s3 + $0x98] sm:$0xff]
    %v213 = vld [vmem:[%s3 + $0xa0] sm:$0xff]
    %v214 = vld [vmem:[%s3 + $0xa8] sm:$0xff]
    %v215 = vld [vmem:[%s3 + $0xb0] sm:$0xff]
    %v216 = vld [vmem:[%s3 + $0xb8] sm:$0xff]
    %v217 = vld [vmem:[%s3 + $0xc0] sm:$0xff]
    %v218 = vld [vmem:[%s3 + $0xc8] sm:$0xff]
    %v219 = vld [vmem:[%s3 + $0xd0] sm:$0xff]
    %v220 = vld [vmem:[%s3 + $0xd8] sm:$0xff]
    %v221 = vld [vmem:[%s3 + $0xe0] sm:$0xff]
    %v222 = vld [vmem:[%s3 + $0xe8] sm:$0xff]
    %v223 = vld [vmem:[%s3 + $0xf0] sm:$0xff]
    %v224 = vld [vmem:[%s3 + $0xf8] sm:$0xff]
    %v225 = vld [vmem:[%s4] sm:$0x3]
    %v227 = vlaneseq
    %v228 = vshrl.u32 %v227, 7
    %v229 = vsub.s32 0, %v228
    %v230 = vrot.slane %v225, %v229
    %v231 = vlaneseq
    %v232 = vshrl.u32 %v231, 7
    %v233 = vsub.s32 1, %v232
    %v234 = vrot.slane %v225, %v233
    %v269 = vunpack.c.l.b16 %v193
    %v270 = vunpack.c.h.b16 %v193
    %v271 = vunpack.c.l.b16 %v194
    %v272 = vunpack.c.h.b16 %v194
    %v273 = vunpack.c.l.b16 %v195
    %v274 = vunpack.c.h.b16 %v195
    %v275 = vunpack.c.l.b16 %v196
    %v276 = vunpack.c.h.b16 %v196
    %v277 = vunpack.c.l.b16 %v197
    %v278 = vunpack.c.h.b16 %v197
    %v279 = vunpack.c.l.b16 %v198
    %v280 = vunpack.c.h.b16 %v198
    %v281 = vunpack.c.l.b16 %v199
    %v282 = vunpack.c.h.b16 %v199
    %v283 = vunpack.c.l.b16 %v200
    %v284 = vunpack.c.h.b16 %v200
    %v285 = vunpack.c.l.b16 %v201
    %v286 = vunpack.c.h.b16 %v201
    %v287 = vunpack.c.l.b16 %v202
    %v288 = vunpack.c.h.b16 %v202
    %v289 = vunpack.c.l.b16 %v203
    %v290 = vunpack.c.h.b16 %v203
    %v291 = vunpack.c.l.b16 %v204
    %v292 = vunpack.c.h.b16 %v204
    %v293 = vunpack.c.l.b16 %v205
    %v294 = vunpack.c.h.b16 %v205
    %v295 = vunpack.c.l.b16 %v206
    %v296 = vunpack.c.h.b16 %v206
    %v297 = vunpack.c.l.b16 %v207
    %v298 = vunpack.c.h.b16 %v207
    %v299 = vunpack.c.l.b16 %v208
    %v300 = vunpack.c.h.b16 %v208
    %v301 = vunpack.c.l.b16 %v209
    %v302 = vunpack.c.h.b16 %v209
    %v303 = vunpack.c.l.b16 %v210
    %v304 = vunpack.c.h.b16 %v210
    %v305 = vunpack.c.l.b16 %v211
    %v306 = vunpack.c.h.b16 %v211
    %v307 = vunpack.c.l.b16 %v212
    %v308 = vunpack.c.h.b16 %v212
    %v309 = vunpack.c.l.b16 %v213
    %v310 = vunpack.c.h.b16 %v213
    %v311 = vunpack.c.l.b16 %v214
    %v312 = vunpack.c.h.b16 %v214
    %v313 = vunpack.c.l.b16 %v215
    %v314 = vunpack.c.h.b16 %v215
    %v315 = vunpack.c.l.b16 %v216
    %v316 = vunpack.c.h.b16 %v216
    %v317 = vunpack.c.l.b16 %v217
    %v318 = vunpack.c.h.b16 %v217
    %v319 = vunpack.c.l.b16 %v218
    %v320 = vunpack.c.h.b16 %v218
    %v321 = vunpack.c.l.b16 %v219
    %v322 = vunpack.c.h.b16 %v219
    %v323 = vunpack.c.l.b16 %v220
    %v324 = vunpack.c.h.b16 %v220
    %v325 = vunpack.c.l.b16 %v221
    %v326 = vunpack.c.h.b16 %v221
    %v327 = vunpack.c.l.b16 %v222
    %v328 = vunpack.c.h.b16 %v222
    %v329 = vunpack.c.l.b16 %v223
    %v330 = vunpack.c.h.b16 %v223
    %v331 = vunpack.c.l.b16 %v224
    %v332 = vunpack.c.h.b16 %v224
    %v333 = vpack.c.b16 %v271, %v269
    %v334 = vpack.c.b16 %v272, %v270
    %v335 = vpack.c.b16 %v275, %v273
    %v336 = vpack.c.b16 %v276, %v274
    %v337 = vpack.c.b16 %v279, %v277
    %v338 = vpack.c.b16 %v280, %v278
    %v339 = vpack.c.b16 %v283, %v281
    %v340 = vpack.c.b16 %v284, %v282
    %v341 = vpack.c.b16 %v287, %v285
    %v342 = vpack.c.b16 %v288, %v286
    %v343 = vpack.c.b16 %v291, %v289
    %v344 = vpack.c.b16 %v292, %v290
    %v345 = vpack.c.b16 %v295, %v293
    %v346 = vpack.c.b16 %v296, %v294
    %v347 = vpack.c.b16 %v299, %v297
    %v348 = vpack.c.b16 %v300, %v298
    %v349 = vpack.c.b16 %v303, %v301
    %v350 = vpack.c.b16 %v304, %v302
    %v351 = vpack.c.b16 %v307, %v305
    %v352 = vpack.c.b16 %v308, %v306
    %v353 = vpack.c.b16 %v311, %v309
    %v354 = vpack.c.b16 %v312, %v310
    %v355 = vpack.c.b16 %v315, %v313
    %v356 = vpack.c.b16 %v316, %v314
    %v357 = vpack.c.b16 %v319, %v317
    %v358 = vpack.c.b16 %v320, %v318
    %v359 = vpack.c.b16 %v323, %v321
    %v360 = vpack.c.b16 %v324, %v322
    %v361 = vpack.c.b16 %v327, %v325
    %v362 = vpack.c.b16 %v328, %v326
    %v363 = vpack.c.b16 %v331, %v329
    %v364 = vpack.c.b16 %v332, %v330
    %397 = vmatprep.subr.bf16.mxu0 %v334
    %398 = vmatpush1.bf16.msra.mxu0 %v333
    %399 = vmatprep.subr.bf16.mxu0 %v336
    %400 = vmatpush1.bf16.msra.mxu0 %v335
    %401 = vmatprep.subr.bf16.mxu0 %v338
    %402 = vmatpush1.bf16.msra.mxu0 %v337
    %403 = vmatprep.subr.bf16.mxu0 %v340
    %404 = vmatpush1.bf16.msra.mxu0 %v339
    %405 = vmatprep.subr.bf16.mxu0 %v342
    %406 = vmatpush1.bf16.msra.mxu0 %v341
    %407 = vmatprep.subr.bf16.mxu0 %v344
    %408 = vmatpush1.bf16.msra.mxu0 %v343
    %409 = vmatprep.subr.bf16.mxu0 %v346
    %410 = vmatpush1.bf16.msra.mxu0 %v345
    %411 = vmatprep.subr.bf16.mxu0 %v348
    %412 = vmatpush1.bf16.msra.mxu0 %v347
    %413 = vmatprep.subr.bf16.mxu0 %v350
    %414 = vmatpush1.bf16.msra.mxu0 %v349
    %415 = vmatprep.subr.bf16.mxu0 %v352
    %416 = vmatpush1.bf16.msra.mxu0 %v351
    %417 = vmatprep.subr.bf16.mxu0 %v354
    %418 = vmatpush1.bf16.msra.mxu0 %v353
    %419 = vmatprep.subr.bf16.mxu0 %v356
    %420 = vmatpush1.bf16.msra.mxu0 %v355
    %421 = vmatprep.subr.bf16.mxu0 %v358
    %422 = vmatpush1.bf16.msra.mxu0 %v357
    %423 = vmatprep.subr.bf16.mxu0 %v360
    %424 = vmatpush1.bf16.msra.mxu0 %v359
    %425 = vmatprep.subr.bf16.mxu0 %v362
    %426 = vmatpush1.bf16.msra.mxu0 %v361
    %427 = vmatprep.subr.bf16.mxu0 %v364
    %428 = vmatpush1.bf16.msra.mxu0 %v363
    %429 = vmatprep.mubr.bf16.mxu0 %v192
    %430 = vmatmul.mubr.bf16.gmra.mrb[0].mxu0 %v191
    %v431 = vpop.f32.mrb[0].mxu0
    %v432 = vadd.f32 %v230, %v431
    %v433 = vpop.f32.mrb[0].mxu0
    %v434 = vadd.f32 %v234, %v433
    %v435 = vpop.f32.mrb[0].mxu0
    %v436 = vadd.f32 %v230, %v435
    %v437 = vpop.f32.mrb[0].mxu0
    %v438 = vadd.f32 %v234, %v437
    %439 = vdwg.mxu0
    %v440 = vmax.f32 %v432, 0.0
    %v441 = vmax.f32 %v434, 0.0
    %v442 = vmax.f32 %v436, 0.0
    %v443 = vmax.f32 %v438, 0.0
    %v444 = vpack.c.bf16 %v442, %v440
    %v445 = vpack.c.bf16 %v443, %v441
    %v446 = vld [vmem:[%s5] sm:$0xff]
    %v447 = vld [vmem:[%s5 + $0x8] sm:$0xff]
    %v448 = vld [vmem:[%s5 + $0x10] sm:$0xff]
    %v449 = vld [vmem:[%s5 + $0x18] sm:$0xf]
    %v450 = vld [vmem:[%s5 + $0x1c] sm:$0xff]
    %v451 = vld [vmem:[%s5 + $0x24] sm:$0xff]
    %v452 = vld [vmem:[%s5 + $0x2c] sm:$0xff]
    %v453 = vld [vmem:[%s5 + $0x34] sm:$0xf]
    %v454 = vld [vmem:[%s5 + $0x38] sm:$0xff]
    %v455 = vld [vmem:[%s5 + $0x40] sm:$0xff]
    %v456 = vld [vmem:[%s5 + $0x48] sm:$0xff]
    %v457 = vld [vmem:[%s5 + $0x50] sm:$0xf]
    %v458 = vld [vmem:[%s5 + $0x54] sm:$0xff]
    %v459 = vld [vmem:[%s5 + $0x5c] sm:$0xff]
    %v460 = vld [vmem:[%s5 + $0x64] sm:$0xff]
    %v461 = vld [vmem:[%s5 + $0x6c] sm:$0xf]
    %v462 = vld [vmem:[%s5 + $0x70] sm:$0xff]
    %v463 = vld [vmem:[%s5 + $0x78] sm:$0xff]
    %v464 = vld [vmem:[%s5 + $0x80] sm:$0xff]
    %v465 = vld [vmem:[%s5 + $0x88] sm:$0xf]
    %v466 = vld [vmem:[%s5 + $0x8c] sm:$0xff]
    %v467 = vld [vmem:[%s5 + $0x94] sm:$0xff]
    %v468 = vld [vmem:[%s5 + $0x9c] sm:$0xff]
    %v469 = vld [vmem:[%s5 + $0xa4] sm:$0xf]
    %v470 = vld [vmem:[%s5 + $0xa8] sm:$0xff]
    %v471 = vld [vmem:[%s5 + $0xb0] sm:$0xff]
    %v472 = vld [vmem:[%s5 + $0xb8] sm:$0xff]
    %v473 = vld [vmem:[%s5 + $0xc0] sm:$0xf]
    %v474 = vld [vmem:[%s5 + $0xc4] sm:$0xff]
    %v475 = vld [vmem:[%s5 + $0xcc] sm:$0xff]
    %v476 = vld [vmem:[%s5 + $0xd4] sm:$0xff]
    %v477 = vld [vmem:[%s5 + $0xdc] sm:$0xf]
    %v478 = vld [vmem:[%s5 + $0xe0] sm:$0xff]
    %v479 = vld [vmem:[%s5 + $0xe8] sm:$0xff]
    %v480 = vld [vmem:[%s5 + $0xf0] sm:$0xff]
    %v481 = vld [vmem:[%s5 + $0xf8] sm:$0xf]
    %v482 = vld [vmem:[%s5 + $0xfc] sm:$0xff]
    %v483 = vld [vmem:[%s5 + $0x104] sm:$0xff]
    %v484 = vld [vmem:[%s5 + $0x10c] sm:$0xff]
    %v485 = vld [vmem:[%s5 + $0x114] sm:$0xf]
    %v486 = vld [vmem:[%s5 + $0x118] sm:$0xff]
    %v487 = vld [vmem:[%s5 + $0x120] sm:$0xff]
    %v488 = vld [vmem:[%s5 + $0x128] sm:$0xff]
    %v489 = vld [vmem:[%s5 + $0x130] sm:$0xf]
    %v490 = vld [vmem:[%s5 + $0x134] sm:$0xff]
    %v491 = vld [vmem:[%s5 + $0x13c] sm:$0xff]
    %v492 = vld [vmem:[%s5 + $0x144] sm:$0xff]
    %v493 = vld [vmem:[%s5 + $0x14c] sm:$0xf]
    %v494 = vld [vmem:[%s5 + $0x150] sm:$0xff]
    %v495 = vld [vmem:[%s5 + $0x158] sm:$0xff]
    %v496 = vld [vmem:[%s5 + $0x160] sm:$0xff]
    %v497 = vld [vmem:[%s5 + $0x168] sm:$0xf]
    %v498 = vld [vmem:[%s5 + $0x16c] sm:$0xff]
    %v499 = vld [vmem:[%s5 + $0x174] sm:$0xff]
    %v500 = vld [vmem:[%s5 + $0x17c] sm:$0xff]
    %v501 = vld [vmem:[%s5 + $0x184] sm:$0xf]
    %v502 = vld [vmem:[%s5 + $0x188] sm:$0xff]
    %v503 = vld [vmem:[%s5 + $0x190] sm:$0xff]
    %v504 = vld [vmem:[%s5 + $0x198] sm:$0xff]
    %v505 = vld [vmem:[%s5 + $0x1a0] sm:$0xf]
    %v506 = vld [vmem:[%s5 + $0x1a4] sm:$0xff]
    %v507 = vld [vmem:[%s5 + $0x1ac] sm:$0xff]
    %v508 = vld [vmem:[%s5 + $0x1b4] sm:$0xff]
    %v509 = vld [vmem:[%s5 + $0x1bc] sm:$0xf]
    %v510 = vld [vmem:[%s5 + $0x1c0] sm:$0xff]
    %v511 = vld [vmem:[%s5 + $0x1c8] sm:$0xff]
    %v512 = vld [vmem:[%s5 + $0x1d0] sm:$0xff]
    %v513 = vld [vmem:[%s5 + $0x1d8] sm:$0xf]
    %v514 = vld [vmem:[%s5 + $0x1dc] sm:$0xff]
    %v515 = vld [vmem:[%s5 + $0x1e4] sm:$0xff]
    %v516 = vld [vmem:[%s5 + $0x1ec] sm:$0xff]
    %v517 = vld [vmem:[%s5 + $0x1f4] sm:$0xf]
    %v518 = vld [vmem:[%s5 + $0x1f8] sm:$0xff]
    %v519 = vld [vmem:[%s5 + $0x200] sm:$0xff]
    %v520 = vld [vmem:[%s5 + $0x208] sm:$0xff]
    %v521 = vld [vmem:[%s5 + $0x210] sm:$0xf]
    %v522 = vld [vmem:[%s5 + $0x214] sm:$0xff]
    %v523 = vld [vmem:[%s5 + $0x21c] sm:$0xff]
    %v524 = vld [vmem:[%s5 + $0x224] sm:$0xff]
    %v525 = vld [vmem:[%s5 + $0x22c] sm:$0xf]
    %v526 = vld [vmem:[%s5 + $0x230] sm:$0xff]
    %v527 = vld [vmem:[%s5 + $0x238] sm:$0xff]
    %v528 = vld [vmem:[%s5 + $0x240] sm:$0xff]
    %v529 = vld [vmem:[%s5 + $0x248] sm:$0xf]
    %v530 = vld [vmem:[%s5 + $0x24c] sm:$0xff]
    %v531 = vld [vmem:[%s5 + $0x254] sm:$0xff]
    %v532 = vld [vmem:[%s5 + $0x25c] sm:$0xff]
    %v533 = vld [vmem:[%s5 + $0x264] sm:$0xf]
    %v534 = vld [vmem:[%s5 + $0x268] sm:$0xff]
    %v535 = vld [vmem:[%s5 + $0x270] sm:$0xff]
    %v536 = vld [vmem:[%s5 + $0x278] sm:$0xff]
    %v537 = vld [vmem:[%s5 + $0x280] sm:$0xf]
    %v538 = vld [vmem:[%s5 + $0x284] sm:$0xff]
    %v539 = vld [vmem:[%s5 + $0x28c] sm:$0xff]
    %v540 = vld [vmem:[%s5 + $0x294] sm:$0xff]
    %v541 = vld [vmem:[%s5 + $0x29c] sm:$0xf]
    %v542 = vld [vmem:[%s5 + $0x2a0] sm:$0xff]
    %v543 = vld [vmem:[%s5 + $0x2a8] sm:$0xff]
    %v544 = vld [vmem:[%s5 + $0x2b0] sm:$0xff]
    %v545 = vld [vmem:[%s5 + $0x2b8] sm:$0xf]
    %v546 = vld [vmem:[%s5 + $0x2bc] sm:$0xff]
    %v547 = vld [vmem:[%s5 + $0x2c4] sm:$0xff]
    %v548 = vld [vmem:[%s5 + $0x2cc] sm:$0xff]
    %v549 = vld [vmem:[%s5 + $0x2d4] sm:$0xf]
    %v550 = vld [vmem:[%s5 + $0x2d8] sm:$0xff]
    %v551 = vld [vmem:[%s5 + $0x2e0] sm:$0xff]
    %v552 = vld [vmem:[%s5 + $0x2e8] sm:$0xff]
    %v553 = vld [vmem:[%s5 + $0x2f0] sm:$0xf]
    %v554 = vld [vmem:[%s5 + $0x2f4] sm:$0xff]
    %v555 = vld [vmem:[%s5 + $0x2fc] sm:$0xff]
    %v556 = vld [vmem:[%s5 + $0x304] sm:$0xff]
    %v557 = vld [vmem:[%s5 + $0x30c] sm:$0xf]
    %v558 = vld [vmem:[%s5 + $0x310] sm:$0xff]
    %v559 = vld [vmem:[%s5 + $0x318] sm:$0xff]
    %v560 = vld [vmem:[%s5 + $0x320] sm:$0xff]
    %v561 = vld [vmem:[%s5 + $0x328] sm:$0xf]
    %v562 = vld [vmem:[%s5 + $0x32c] sm:$0xff]
    %v563 = vld [vmem:[%s5 + $0x334] sm:$0xff]
    %v564 = vld [vmem:[%s5 + $0x33c] sm:$0xff]
    %v565 = vld [vmem:[%s5 + $0x344] sm:$0xf]
    %v566 = vld [vmem:[%s5 + $0x348] sm:$0xff]
    %v567 = vld [vmem:[%s5 + $0x350] sm:$0xff]
    %v568 = vld [vmem:[%s5 + $0x358] sm:$0xff]
    %v569 = vld [vmem:[%s5 + $0x360] sm:$0xf]
    %v570 = vld [vmem:[%s5 + $0x364] sm:$0xff]
    %v571 = vld [vmem:[%s5 + $0x36c] sm:$0xff]
    %v572 = vld [vmem:[%s5 + $0x374] sm:$0xff]
    %v573 = vld [vmem:[%s5 + $0x37c] sm:$0xf]
    %v574 = vld [vmem:[%s6] sm:$0x7f]
    %v576 = vlaneseq
    %v577 = vshrl.u32 %v576, 7
    %v578 = vsub.s32 0, %v577
    %v579 = vrot.slane %v574, %v578
    %v580 = vlaneseq
    %v581 = vshrl.u32 %v580, 7
    %v582 = vsub.s32 1, %v581
    %v583 = vrot.slane %v574, %v582
    %v584 = vlaneseq
    %v585 = vshrl.u32 %v584, 7
    %v586 = vsub.s32 2, %v585
    %v587 = vrot.slane %v574, %v586
    %v588 = vlaneseq
    %v589 = vshrl.u32 %v588, 7
    %v590 = vsub.s32 3, %v589
    %v591 = vrot.slane %v574, %v590
    %v592 = vlaneseq
    %v593 = vshrl.u32 %v592, 7
    %v594 = vsub.s32 4, %v593
    %v595 = vrot.slane %v574, %v594
    %v596 = vlaneseq
    %v597 = vshrl.u32 %v596, 7
    %v598 = vsub.s32 5, %v597
    %v599 = vrot.slane %v574, %v598
    %v600 = vlaneseq
    %v601 = vshrl.u32 %v600, 7
    %v602 = vsub.s32 6, %v601
    %v603 = vrot.slane %v574, %v602
    %v739 = vunpack.c.l.b16 %v446
    %v740 = vunpack.c.h.b16 %v446
    %v741 = vunpack.c.l.b16 %v447
    %v742 = vunpack.c.h.b16 %v447
    %v743 = vunpack.c.l.b16 %v448
    %v744 = vunpack.c.h.b16 %v448
    %v745 = vunpack.c.l.b16 %v449
    %v746 = vunpack.c.l.b16 %v450
    %v747 = vunpack.c.h.b16 %v450
    %v748 = vunpack.c.l.b16 %v451
    %v749 = vunpack.c.h.b16 %v451
    %v750 = vunpack.c.l.b16 %v452
    %v751 = vunpack.c.h.b16 %v452
    %v752 = vunpack.c.l.b16 %v453
    %v753 = vunpack.c.l.b16 %v454
    %v754 = vunpack.c.h.b16 %v454
    %v755 = vunpack.c.l.b16 %v455
    %v756 = vunpack.c.h.b16 %v455
    %v757 = vunpack.c.l.b16 %v456
    %v758 = vunpack.c.h.b16 %v456
    %v759 = vunpack.c.l.b16 %v457
    %v760 = vunpack.c.l.b16 %v458
    %v761 = vunpack.c.h.b16 %v458
    %v762 = vunpack.c.l.b16 %v459
    %v763 = vunpack.c.h.b16 %v459
    %v764 = vunpack.c.l.b16 %v460
    %v765 = vunpack.c.h.b16 %v460
    %v766 = vunpack.c.l.b16 %v461
    %v767 = vunpack.c.l.b16 %v462
    %v768 = vunpack.c.h.b16 %v462
    %v769 = vunpack.c.l.b16 %v463
    %v770 = vunpack.c.h.b16 %v463
    %v771 = vunpack.c.l.b16 %v464
    %v772 = vunpack.c.h.b16 %v464
    %v773 = vunpack.c.l.b16 %v465
    %v774 = vunpack.c.l.b16 %v466
    %v775 = vunpack.c.h.b16 %v466
    %v776 = vunpack.c.l.b16 %v467
    %v777 = vunpack.c.h.b16 %v467
    %v778 = vunpack.c.l.b16 %v468
    %v779 = vunpack.c.h.b16 %v468
    %v780 = vunpack.c.l.b16 %v469
    %v781 = vunpack.c.l.b16 %v470
    %v782 = vunpack.c.h.b16 %v470
    %v783 = vunpack.c.l.b16 %v471
    %v784 = vunpack.c.h.b16 %v471
    %v785 = vunpack.c.l.b16 %v472
    %v786 = vunpack.c.h.b16 %v472
    %v787 = vunpack.c.l.b16 %v473
    %v788 = vunpack.c.l.b16 %v474
    %v789 = vunpack.c.h.b16 %v474
    %v790 = vunpack.c.l.b16 %v475
    %v791 = vunpack.c.h.b16 %v475
    %v792 = vunpack.c.l.b16 %v476
    %v793 = vunpack.c.h.b16 %v476
    %v794 = vunpack.c.l.b16 %v477
    %v795 = vunpack.c.l.b16 %v478
    %v796 = vunpack.c.h.b16 %v478
    %v797 = vunpack.c.l.b16 %v479
    %v798 = vunpack.c.h.b16 %v479
    %v799 = vunpack.c.l.b16 %v480
    %v800 = vunpack.c.h.b16 %v480
    %v801 = vunpack.c.l.b16 %v481
    %v802 = vunpack.c.l.b16 %v482
    %v803 = vunpack.c.h.b16 %v482
    %v804 = vunpack.c.l.b16 %v483
    %v805 = vunpack.c.h.b16 %v483
    %v806 = vunpack.c.l.b16 %v484
    %v807 = vunpack.c.h.b16 %v484
    %v808 = vunpack.c.l.b16 %v485
    %v809 = vunpack.c.l.b16 %v486
    %v810 = vunpack.c.h.b16 %v486
    %v811 = vunpack.c.l.b16 %v487
    %v812 = vunpack.c.h.b16 %v487
    %v813 = vunpack.c.l.b16 %v488
    %v814 = vunpack.c.h.b16 %v488
    %v815 = vunpack.c.l.b16 %v489
    %v816 = vunpack.c.l.b16 %v490
    %v817 = vunpack.c.h.b16 %v490
    %v818 = vunpack.c.l.b16 %v491
    %v819 = vunpack.c.h.b16 %v491
    %v820 = vunpack.c.l.b16 %v492
    %v821 = vunpack.c.h.b16 %v492
    %v822 = vunpack.c.l.b16 %v493
    %v823 = vunpack.c.l.b16 %v494
    %v824 = vunpack.c.h.b16 %v494
    %v825 = vunpack.c.l.b16 %v495
    %v826 = vunpack.c.h.b16 %v495
    %v827 = vunpack.c.l.b16 %v496
    %v828 = vunpack.c.h.b16 %v496
    %v829 = vunpack.c.l.b16 %v497
    %v830 = vunpack.c.l.b16 %v498
    %v831 = vunpack.c.h.b16 %v498
    %v832 = vunpack.c.l.b16 %v499
    %v833 = vunpack.c.h.b16 %v499
    %v834 = vunpack.c.l.b16 %v500
    %v835 = vunpack.c.h.b16 %v500
    %v836 = vunpack.c.l.b16 %v501
    %v837 = vunpack.c.l.b16 %v502
    %v838 = vunpack.c.h.b16 %v502
    %v839 = vunpack.c.l.b16 %v503
    %v840 = vunpack.c.h.b16 %v503
    %v841 = vunpack.c.l.b16 %v504
    %v842 = vunpack.c.h.b16 %v504
    %v843 = vunpack.c.l.b16 %v505
    %v844 = vunpack.c.l.b16 %v506
    %v845 = vunpack.c.h.b16 %v506
    %v846 = vunpack.c.l.b16 %v507
    %v847 = vunpack.c.h.b16 %v507
    %v848 = vunpack.c.l.b16 %v508
    %v849 = vunpack.c.h.b16 %v508
    %v850 = vunpack.c.l.b16 %v509
    %v851 = vunpack.c.l.b16 %v510
    %v852 = vunpack.c.h.b16 %v510
    %v853 = vunpack.c.l.b16 %v511
    %v854 = vunpack.c.h.b16 %v511
    %v855 = vunpack.c.l.b16 %v512
    %v856 = vunpack.c.h.b16 %v512
    %v857 = vunpack.c.l.b16 %v513
    %v858 = vunpack.c.l.b16 %v514
    %v859 = vunpack.c.h.b16 %v514
    %v860 = vunpack.c.l.b16 %v515
    %v861 = vunpack.c.h.b16 %v515
    %v862 = vunpack.c.l.b16 %v516
    %v863 = vunpack.c.h.b16 %v516
    %v864 = vunpack.c.l.b16 %v517
    %v865 = vunpack.c.l.b16 %v518
    %v866 = vunpack.c.h.b16 %v518
    %v867 = vunpack.c.l.b16 %v519
    %v868 = vunpack.c.h.b16 %v519
    %v869 = vunpack.c.l.b16 %v520
    %v870 = vunpack.c.h.b16 %v520
    %v871 = vunpack.c.l.b16 %v521
    %v872 = vunpack.c.l.b16 %v522
    %v873 = vunpack.c.h.b16 %v522
    %v874 = vunpack.c.l.b16 %v523
    %v875 = vunpack.c.h.b16 %v523
    %v876 = vunpack.c.l.b16 %v524
    %v877 = vunpack.c.h.b16 %v524
    %v878 = vunpack.c.l.b16 %v525
    %v879 = vunpack.c.l.b16 %v526
    %v880 = vunpack.c.h.b16 %v526
    %v881 = vunpack.c.l.b16 %v527
    %v882 = vunpack.c.h.b16 %v527
    %v883 = vunpack.c.l.b16 %v528
    %v884 = vunpack.c.h.b16 %v528
    %v885 = vunpack.c.l.b16 %v529
    %v886 = vunpack.c.l.b16 %v530
    %v887 = vunpack.c.h.b16 %v530
    %v888 = vunpack.c.l.b16 %v531
    %v889 = vunpack.c.h.b16 %v531
    %v890 = vunpack.c.l.b16 %v532
    %v891 = vunpack.c.h.b16 %v532
    %v892 = vunpack.c.l.b16 %v533
    %v893 = vunpack.c.l.b16 %v534
    %v894 = vunpack.c.h.b16 %v534
    %v895 = vunpack.c.l.b16 %v535
    %v896 = vunpack.c.h.b16 %v535
    %v897 = vunpack.c.l.b16 %v536
    %v898 = vunpack.c.h.b16 %v536
    %v899 = vunpack.c.l.b16 %v537
    %v900 = vunpack.c.l.b16 %v538
    %v901 = vunpack.c.h.b16 %v538
    %v902 = vunpack.c.l.b16 %v539
    %v903 = vunpack.c.h.b16 %v539
    %v904 = vunpack.c.l.b16 %v540
    %v905 = vunpack.c.h.b16 %v540
    %v906 = vunpack.c.l.b16 %v541
    %v907 = vunpack.c.l.b16 %v542
    %v908 = vunpack.c.h.b16 %v542
    %v909 = vunpack.c.l.b16 %v543
    %v910 = vunpack.c.h.b16 %v543
    %v911 = vunpack.c.l.b16 %v544
    %v912 = vunpack.c.h.b16 %v544
    %v913 = vunpack.c.l.b16 %v545
    %v914 = vunpack.c.l.b16 %v546
    %v915 = vunpack.c.h.b16 %v546
    %v916 = vunpack.c.l.b16 %v547
    %v917 = vunpack.c.h.b16 %v547
    %v918 = vunpack.c.l.b16 %v548
    %v919 = vunpack.c.h.b16 %v548
    %v920 = vunpack.c.l.b16 %v549
    %v921 = vunpack.c.l.b16 %v550
    %v922 = vunpack.c.h.b16 %v550
    %v923 = vunpack.c.l.b16 %v551
    %v924 = vunpack.c.h.b16 %v551
    %v925 = vunpack.c.l.b16 %v552
    %v926 = vunpack.c.h.b16 %v552
    %v927 = vunpack.c.l.b16 %v553
    %v928 = vunpack.c.l.b16 %v554
    %v929 = vunpack.c.h.b16 %v554
    %v930 = vunpack.c.l.b16 %v555
    %v931 = vunpack.c.h.b16 %v555
    %v932 = vunpack.c.l.b16 %v556
    %v933 = vunpack.c.h.b16 %v556
    %v934 = vunpack.c.l.b16 %v557
    %v935 = vunpack.c.l.b16 %v558
    %v936 = vunpack.c.h.b16 %v558
    %v937 = vunpack.c.l.b16 %v559
    %v938 = vunpack.c.h.b16 %v559
    %v939 = vunpack.c.l.b16 %v560
    %v940 = vunpack.c.h.b16 %v560
    %v941 = vunpack.c.l.b16 %v561
    %v942 = vunpack.c.l.b16 %v562
    %v943 = vunpack.c.h.b16 %v562
    %v944 = vunpack.c.l.b16 %v563
    %v945 = vunpack.c.h.b16 %v563
    %v946 = vunpack.c.l.b16 %v564
    %v947 = vunpack.c.h.b16 %v564
    %v948 = vunpack.c.l.b16 %v565
    %v949 = vunpack.c.l.b16 %v566
    %v950 = vunpack.c.h.b16 %v566
    %v951 = vunpack.c.l.b16 %v567
    %v952 = vunpack.c.h.b16 %v567
    %v953 = vunpack.c.l.b16 %v568
    %v954 = vunpack.c.h.b16 %v568
    %v955 = vunpack.c.l.b16 %v569
    %v956 = vunpack.c.l.b16 %v570
    %v957 = vunpack.c.h.b16 %v570
    %v958 = vunpack.c.l.b16 %v571
    %v959 = vunpack.c.h.b16 %v571
    %v960 = vunpack.c.l.b16 %v572
    %v961 = vunpack.c.h.b16 %v572
    %v962 = vunpack.c.l.b16 %v573
    %v963 = vpack.c.b16 %v746, %v739
    %v964 = vpack.c.b16 %v747, %v740
    %v965 = vpack.c.b16 %v748, %v741
    %v966 = vpack.c.b16 %v749, %v742
    %v967 = vpack.c.b16 %v750, %v743
    %v968 = vpack.c.b16 %v751, %v744
    %v969 = vpack.c.b16 %v752, %v745
    %v970 = vpack.c.b16 %v760, %v753
    %v971 = vpack.c.b16 %v761, %v754
    %v972 = vpack.c.b16 %v762, %v755
    %v973 = vpack.c.b16 %v763, %v756
    %v974 = vpack.c.b16 %v764, %v757
    %v975 = vpack.c.b16 %v765, %v758
    %v976 = vpack.c.b16 %v766, %v759
    %v977 = vpack.c.b16 %v774, %v767
    %v978 = vpack.c.b16 %v775, %v768
    %v979 = vpack.c.b16 %v776, %v769
    %v980 = vpack.c.b16 %v777, %v770
    %v981 = vpack.c.b16 %v778, %v771
    %v982 = vpack.c.b16 %v779, %v772
    %v983 = vpack.c.b16 %v780, %v773
    %v984 = vpack.c.b16 %v788, %v781
    %v985 = vpack.c.b16 %v789, %v782
    %v986 = vpack.c.b16 %v790, %v783
    %v987 = vpack.c.b16 %v791, %v784
    %v988 = vpack.c.b16 %v792, %v785
    %v989 = vpack.c.b16 %v793, %v786
    %v990 = vpack.c.b16 %v794, %v787
    %v991 = vpack.c.b16 %v802, %v795
    %v992 = vpack.c.b16 %v803, %v796
    %v993 = vpack.c.b16 %v804, %v797
    %v994 = vpack.c.b16 %v805, %v798
    %v995 = vpack.c.b16 %v806, %v799
    %v996 = vpack.c.b16 %v807, %v800
    %v997 = vpack.c.b16 %v808, %v801
    %v998 = vpack.c.b16 %v816, %v809
    %v999 = vpack.c.b16 %v817, %v810
    %v1000 = vpack.c.b16 %v818, %v811
    %v1001 = vpack.c.b16 %v819, %v812
    %v1002 = vpack.c.b16 %v820, %v813
    %v1003 = vpack.c.b16 %v821, %v814
    %v1004 = vpack.c.b16 %v822, %v815
    %v1005 = vpack.c.b16 %v830, %v823
    %v1006 = vpack.c.b16 %v831, %v824
    %v1007 = vpack.c.b16 %v832, %v825
    %v1008 = vpack.c.b16 %v833, %v826
    %v1009 = vpack.c.b16 %v834, %v827
    %v1010 = vpack.c.b16 %v835, %v828
    %v1011 = vpack.c.b16 %v836, %v829
    %v1012 = vpack.c.b16 %v844, %v837
    %v1013 = vpack.c.b16 %v845, %v838
    %v1014 = vpack.c.b16 %v846, %v839
    %v1015 = vpack.c.b16 %v847, %v840
    %v1016 = vpack.c.b16 %v848, %v841
    %v1017 = vpack.c.b16 %v849, %v842
    %v1018 = vpack.c.b16 %v850, %v843
    %v1019 = vpack.c.b16 %v858, %v851
    %v1020 = vpack.c.b16 %v859, %v852
    %v1021 = vpack.c.b16 %v860, %v853
    %v1022 = vpack.c.b16 %v861, %v854
    %v1023 = vpack.c.b16 %v862, %v855
    %v1024 = vpack.c.b16 %v863, %v856
    %v1025 = vpack.c.b16 %v864, %v857
    %v1026 = vpack.c.b16 %v872, %v865
    %v1027 = vpack.c.b16 %v873, %v866
    %v1028 = vpack.c.b16 %v874, %v867
    %v1029 = vpack.c.b16 %v875, %v868
    %v1030 = vpack.c.b16 %v876, %v869
    %v1031 = vpack.c.b16 %v877, %v870
    %v1032 = vpack.c.b16 %v878, %v871
    %v1033 = vpack.c.b16 %v886, %v879
    %v1034 = vpack.c.b16 %v887, %v880
    %v1035 = vpack.c.b16 %v888, %v881
    %v1036 = vpack.c.b16 %v889, %v882
    %v1037 = vpack.c.b16 %v890, %v883
    %v1038 = vpack.c.b16 %v891, %v884
    %v1039 = vpack.c.b16 %v892, %v885
    %v1040 = vpack.c.b16 %v900, %v893
    %v1041 = vpack.c.b16 %v901, %v894
    %v1042 = vpack.c.b16 %v902, %v895
    %v1043 = vpack.c.b16 %v903, %v896
    %v1044 = vpack.c.b16 %v904, %v897
    %v1045 = vpack.c.b16 %v905, %v898
    %v1046 = vpack.c.b16 %v906, %v899
    %v1047 = vpack.c.b16 %v914, %v907
    %v1048 = vpack.c.b16 %v915, %v908
    %v1049 = vpack.c.b16 %v916, %v909
    %v1050 = vpack.c.b16 %v917, %v910
    %v1051 = vpack.c.b16 %v918, %v911
    %v1052 = vpack.c.b16 %v919, %v912
    %v1053 = vpack.c.b16 %v920, %v913
    %v1054 = vpack.c.b16 %v928, %v921
    %v1055 = vpack.c.b16 %v929, %v922
    %v1056 = vpack.c.b16 %v930, %v923
    %v1057 = vpack.c.b16 %v931, %v924
    %v1058 = vpack.c.b16 %v932, %v925
    %v1059 = vpack.c.b16 %v933, %v926
    %v1060 = vpack.c.b16 %v934, %v927
    %v1061 = vpack.c.b16 %v942, %v935
    %v1062 = vpack.c.b16 %v943, %v936
    %v1063 = vpack.c.b16 %v944, %v937
    %v1064 = vpack.c.b16 %v945, %v938
    %v1065 = vpack.c.b16 %v946, %v939
    %v1066 = vpack.c.b16 %v947, %v940
    %v1067 = vpack.c.b16 %v948, %v941
    %v1068 = vpack.c.b16 %v956, %v949
    %v1069 = vpack.c.b16 %v957, %v950
    %v1070 = vpack.c.b16 %v958, %v951
    %v1071 = vpack.c.b16 %v959, %v952
    %v1072 = vpack.c.b16 %v960, %v953
    %v1073 = vpack.c.b16 %v961, %v954
    %v1074 = vpack.c.b16 %v962, %v955
    %1187 = vmatprep.subr.bf16.mxu0 %v964
    %1188 = vmatpush1.bf16.msra.mxu0 %v963
    %1189 = vmatprep.subr.bf16.mxu0 %v971
    %1190 = vmatpush1.bf16.msra.mxu0 %v970
    %1191 = vmatprep.subr.bf16.mxu0 %v978
    %1192 = vmatpush1.bf16.msra.mxu0 %v977
    %1193 = vmatprep.subr.bf16.mxu0 %v985
    %1194 = vmatpush1.bf16.msra.mxu0 %v984
    %1195 = vmatprep.subr.bf16.mxu0 %v992
    %1196 = vmatpush1.bf16.msra.mxu0 %v991
    %1197 = vmatprep.subr.bf16.mxu0 %v999
    %1198 = vmatpush1.bf16.msra.mxu0 %v998
    %1199 = vmatprep.subr.bf16.mxu0 %v1006
    %1200 = vmatpush1.bf16.msra.mxu0 %v1005
    %1201 = vmatprep.subr.bf16.mxu0 %v1013
    %1202 = vmatpush1.bf16.msra.mxu0 %v1012
    %1203 = vmatprep.subr.bf16.mxu0 %v1020
    %1204 = vmatpush1.bf16.msra.mxu0 %v1019
    %1205 = vmatprep.subr.bf16.mxu0 %v1027
    %1206 = vmatpush1.bf16.msra.mxu0 %v1026
    %1207 = vmatprep.subr.bf16.mxu0 %v1034
    %1208 = vmatpush1.bf16.msra.mxu0 %v1033
    %1209 = vmatprep.subr.bf16.mxu0 %v1041
    %1210 = vmatpush1.bf16.msra.mxu0 %v1040
    %1211 = vmatprep.subr.bf16.mxu0 %v1048
    %1212 = vmatpush1.bf16.msra.mxu0 %v1047
    %1213 = vmatprep.subr.bf16.mxu0 %v1055
    %1214 = vmatpush1.bf16.msra.mxu0 %v1054
    %1215 = vmatprep.subr.bf16.mxu0 %v1062
    %1216 = vmatpush1.bf16.msra.mxu0 %v1061
    %1217 = vmatprep.subr.bf16.mxu0 %v1069
    %1218 = vmatpush1.bf16.msra.mxu0 %v1068
    %1219 = vmatprep.mubr.bf16.mxu0 %v445
    %1220 = vmatmul.mubr.bf16.gmra.mrb[0].mxu0 %v444
    %v1221 = vpop.f32.mrb[0].mxu0
    %v1222 = vadd.f32 %v579, %v1221
    %v1223 = vpop.f32.mrb[0].mxu0
    %v1224 = vadd.f32 %v583, %v1223
    %v1225 = vpop.f32.mrb[0].mxu0
    %v1226 = vadd.f32 %v579, %v1225
    %v1227 = vpop.f32.mrb[0].mxu0
    %v1228 = vadd.f32 %v583, %v1227
    %1229 = vdwg.mxu0
    %1230 = vmatprep.subr.bf16.mxu0 %v966
    %1231 = vmatpush1.bf16.msra.mxu0 %v965
    %1232 = vmatprep.subr.bf16.mxu0 %v973
    %1233 = vmatpush1.bf16.msra.mxu0 %v972
    %1234 = vmatprep.subr.bf16.mxu0 %v980
    %1235 = vmatpush1.bf16.msra.mxu0 %v979
    %1236 = vmatprep.subr.bf16.mxu0 %v987
    %1237 = vmatpush1.bf16.msra.mxu0 %v986
    %1238 = vmatprep.subr.bf16.mxu0 %v994
    %1239 = vmatpush1.bf16.msra.mxu0 %v993
    %1240 = vmatprep.subr.bf16.mxu0 %v1001
    %1241 = vmatpush1.bf16.msra.mxu0 %v1000
    %1242 = vmatprep.subr.bf16.mxu0 %v1008
    %1243 = vmatpush1.bf16.msra.mxu0 %v1007
    %1244 = vmatprep.subr.bf16.mxu0 %v1015
    %1245 = vmatpush1.bf16.msra.mxu0 %v1014
    %1246 = vmatprep.subr.bf16.mxu0 %v1022
    %1247 = vmatpush1.bf16.msra.mxu0 %v1021
    %1248 = vmatprep.subr.bf16.mxu0 %v1029
    %1249 = vmatpush1.bf16.msra.mxu0 %v1028
    %1250 = vmatprep.subr.bf16.mxu0 %v1036
    %1251 = vmatpush1.bf16.msra.mxu0 %v1035
    %1252 = vmatprep.subr.bf16.mxu0 %v1043
    %1253 = vmatpush1.bf16.msra.mxu0 %v1042
    %1254 = vmatprep.subr.bf16.mxu0 %v1050
    %1255 = vmatpush1.bf16.msra.mxu0 %v1049
    %1256 = vmatprep.subr.bf16.mxu0 %v1057
    %1257 = vmatpush1.bf16.msra.mxu0 %v1056
    %1258 = vmatprep.subr.bf16.mxu0 %v1064
    %1259 = vmatpush1.bf16.msra.mxu0 %v1063
    %1260 = vmatprep.subr.bf16.mxu0 %v1071
    %1261 = vmatpush1.bf16.msra.mxu0 %v1070
    %1262 = vmatprep.mubr.bf16.mxu0 %v445
    %1263 = vmatmul.mubr.bf16.gmra.mrb[0].mxu0 %v444
    %v1264 = vpop.f32.mrb[0].mxu0
    %v1265 = vadd.f32 %v587, %v1264
    %v1266 = vpop.f32.mrb[0].mxu0
    %v1267 = vadd.f32 %v591, %v1266
    %v1268 = vpop.f32.mrb[0].mxu0
    %v1269 = vadd.f32 %v587, %v1268
    %v1270 = vpop.f32.mrb[0].mxu0
    %v1271 = vadd.f32 %v591, %v1270
    %1272 = vdwg.mxu0
    %1273 = vmatprep.subr.bf16.mxu0 %v968
    %1274 = vmatpush1.bf16.msra.mxu0 %v967
    %1275 = vmatprep.subr.bf16.mxu0 %v975
    %1276 = vmatpush1.bf16.msra.mxu0 %v974
    %1277 = vmatprep.subr.bf16.mxu0 %v982
    %1278 = vmatpush1.bf16.msra.mxu0 %v981
    %1279 = vmatprep.subr.bf16.mxu0 %v989
    %1280 = vmatpush1.bf16.msra.mxu0 %v988
    %1281 = vmatprep.subr.bf16.mxu0 %v996
    %1282 = vmatpush1.bf16.msra.mxu0 %v995
    %1283 = vmatprep.subr.bf16.mxu0 %v1003
    %1284 = vmatpush1.bf16.msra.mxu0 %v1002
    %1285 = vmatprep.subr.bf16.mxu0 %v1010
    %1286 = vmatpush1.bf16.msra.mxu0 %v1009
    %1287 = vmatprep.subr.bf16.mxu0 %v1017
    %1288 = vmatpush1.bf16.msra.mxu0 %v1016
    %1289 = vmatprep.subr.bf16.mxu0 %v1024
    %1290 = vmatpush1.bf16.msra.mxu0 %v1023
    %1291 = vmatprep.subr.bf16.mxu0 %v1031
    %1292 = vmatpush1.bf16.msra.mxu0 %v1030
    %1293 = vmatprep.subr.bf16.mxu0 %v1038
    %1294 = vmatpush1.bf16.msra.mxu0 %v1037
    %1295 = vmatprep.subr.bf16.mxu0 %v1045
    %1296 = vmatpush1.bf16.msra.mxu0 %v1044
    %1297 = vmatprep.subr.bf16.mxu0 %v1052
    %1298 = vmatpush1.bf16.msra.mxu0 %v1051
    %1299 = vmatprep.subr.bf16.mxu0 %v1059
    %1300 = vmatpush1.bf16.msra.mxu0 %v1058
    %1301 = vmatprep.subr.bf16.mxu0 %v1066
    %1302 = vmatpush1.bf16.msra.mxu0 %v1065
    %1303 = vmatprep.subr.bf16.mxu0 %v1073
    %1304 = vmatpush1.bf16.msra.mxu0 %v1072
    %1305 = vmatprep.mubr.bf16.mxu0 %v445
    %1306 = vmatmul.mubr.bf16.gmra.mrb[0].mxu0 %v444
    %v1307 = vpop.f32.mrb[0].mxu0
    %v1308 = vadd.f32 %v595, %v1307
    %v1309 = vpop.f32.mrb[0].mxu0
    %v1310 = vadd.f32 %v599, %v1309
    %v1311 = vpop.f32.mrb[0].mxu0
    %v1312 = vadd.f32 %v595, %v1311
    %v1313 = vpop.f32.mrb[0].mxu0
    %v1314 = vadd.f32 %v599, %v1313
    %1315 = vdwg.mxu0
    %1316 = vmatprep.subr.bf16.mxu0 0
    %1317 = vmatpush1.bf16.msra.mxu0 %v969
    %1318 = vmatprep.subr.bf16.mxu0 0
    %1319 = vmatpush1.bf16.msra.mxu0 %v976
    %1320 = vmatprep.subr.bf16.mxu0 0
    %1321 = vmatpush1.bf16.msra.mxu0 %v983
    %1322 = vmatprep.subr.bf16.mxu0 0
    %1323 = vmatpush1.bf16.msra.mxu0 %v990
    %1324 = vmatprep.subr.bf16.mxu0 0
    %1325 = vmatpush1.bf16.msra.mxu0 %v997
    %1326 = vmatprep.subr.bf16.mxu0 0
    %1327 = vmatpush1.bf16.msra.mxu0 %v1004
    %1328 = vmatprep.subr.bf16.mxu0 0
    %1329 = vmatpush1.bf16.msra.mxu0 %v1011
    %1330 = vmatprep.subr.bf16.mxu0 0
    %1331 = vmatpush1.bf16.msra.mxu0 %v1018
    %1332 = vmatprep.subr.bf16.mxu0 0
    %1333 = vmatpush1.bf16.msra.mxu0 %v1025
    %1334 = vmatprep.subr.bf16.mxu0 0
    %1335 = vmatpush1.bf16.msra.mxu0 %v1032
    %1336 = vmatprep.subr.bf16.mxu0 0
    %1337 = vmatpush1.bf16.msra.mxu0 %v1039
    %1338 = vmatprep.subr.bf16.mxu0 0
    %1339 = vmatpush1.bf16.msra.mxu0 %v1046
    %1340 = vmatprep.subr.bf16.mxu0 0
    %1341 = vmatpush1.bf16.msra.mxu0 %v1053
    %1342 = vmatprep.subr.bf16.mxu0 0
    %1343 = vmatpush1.bf16.msra.mxu0 %v1060
    %1344 = vmatprep.subr.bf16.mxu0 0
    %1345 = vmatpush1.bf16.msra.mxu0 %v1067
    %1346 = vmatprep.subr.bf16.mxu0 0
    %1347 = vmatpush1.bf16.msra.mxu0 %v1074
    %1348 = vmatprep.mubr.bf16.mxu0 %v445
    %1349 = vmatmul.mubr.bf16.gmra.mrb[0].mxu0 %v444
    %v1350 = vpop.f32.mrb[0].mxu0
    %v1351 = vadd.f32 %v603, %v1350
    %v1352 = vpop.f32.mrb[0].mxu0
    %v1353 = vpop.f32.mrb[0].mxu0
    %v1354 = vadd.f32 %v603, %v1353
    %v1355 = vpop.f32.mrb[0].mxu0
    %1356 = vdwg.mxu0
    %v1357 = vtanh.pop %v1222
    %v1358 = vtanh.pop %v1224
    %v1359 = vtanh.pop %v1265
    %v1360 = vtanh.pop %v1267
    %v1361 = vtanh.pop %v1308
    %v1362 = vtanh.pop %v1310
    %v1363 = vtanh.pop %v1351
    %v1364 = vtanh.pop %v1226
    %v1365 = vtanh.pop %v1228
    %v1366 = vtanh.pop %v1269
    %v1367 = vtanh.pop %v1271
    %v1368 = vtanh.pop %v1312
    %v1369 = vtanh.pop %v1314
    %v1370 = vtanh.pop %v1354
    %1371 = vst [vmem:[#allocation2] sm:$0xff] %v1357
    %1372 = vst [vmem:[#allocation2 + $0x8] sm:$0xff] %v1358
    %1373 = vst [vmem:[#allocation2 + $0x10] sm:$0xff] %v1359
    %1374 = vst [vmem:[#allocation2 + $0x18] sm:$0xff] %v1360
    %1375 = vst [vmem:[#allocation2 + $0x20] sm:$0xff] %v1361
    %1376 = vst [vmem:[#allocation2 + $0x28] sm:$0xff] %v1362
    %vm1377 = vcmask 130048
    %1378 = vst.msk [vmem:[#allocation2 + $0x30] sm:$0xff] %vm1377, %v1363
    %1379 = vst [vmem:[#allocation2 + $0x38] sm:$0xff] %v1364
    %1380 = vst [vmem:[#allocation2 + $0x40] sm:$0xff] %v1365
    %1381 = vst [vmem:[#allocation2 + $0x48] sm:$0xff] %v1366
    %1382 = vst [vmem:[#allocation2 + $0x50] sm:$0xff] %v1367
    %1383 = vst [vmem:[#allocation2 + $0x58] sm:$0xff] %v1368
    %1384 = vst [vmem:[#allocation2 + $0x60] sm:$0xff] %v1369
    %1385 = vst.msk [vmem:[#allocation2 + $0x68] sm:$0xff] %vm1377, %v1370
    // Predicated region
    $region30: #{tpu_custom_call.1} parent=1 // pred_check
      _
    $region31: #{tpu_custom_call.1} parent=1 // pred_check_branch
      %1387 = sbr.rel (0) target = $region33
    $region32: #{tpu_custom_call.1} parent=1 // pred_region
      %s1389 = ssub.s32 1792, 1792
      %1390 = vsyncadd [#allocation3], %s1389
      %s1391 = sshll.u32 [#allocation2], 4
      %s1392 = int_to_ptr.vmem [resolvable:$true] %s1391
      %1397 = dma.vmem_to_hbm [thread:$0]  %s1392, 1792, %s7, [#allocation3], 896, 896, 56
    $region33: #{tpu_custom_call.1} parent=1 // pred_fallthru
      _
    // Predicated region
    $region34: #{tpu_custom_call.1} parent=1 // pred_check
      _
    $region35: #{tpu_custom_call.1} parent=1 // pred_check_branch
      %1399 = sbr.rel (0) target = $region37
    $region36: #{tpu_custom_call.1} parent=1 // pred_region
      %1400 = dma.done [#allocation3], 1792
    $region37: #{tpu_custom_call.1} parent=1 // pred_fallthru
      _
    %1401 = vsyncpa [#allocation3], 1

</llo_original>
